<compile_context>
chip_gen: v7x
topology: tpu7x:2x2x1
jax: 0.10.0
libtpu: 0.0.40
codegen_flags: <defaults>
</compile_context>

<pallas_src>
import jax
import jax.numpy as jnp
from jax.experimental import pallas as pl
from jax.experimental.pallas import tpu as pltpu

_LANES = 128      # vreg lane width (fast axis)
_SUBLANES = 8     # vreg sublane count (slow axis)


def _constant_kernel(b_ref, o_ref):
    # b_ref: (1,) f32 bias living in SMEM (single sreg read -> vector splat).
    # o_ref: (TR, 128) lane-dense output tile in VMEM.
    b = b_ref[0]
    o_ref[...] = jnp.full(o_ref.shape, b, dtype=o_ref.dtype)


def constant_forward(geno_tracks, anno_tracks, weight, bias):
    """Pallas equivalent of Constant.forward.

    weight: (1, D) like nn.Linear.weight  (unused: (0*x) @ W^T == 0)
    bias:   (1,)   like nn.Linear.bias
    """
    del geno_tracks   # unused in the reference forward
    del weight        # Linear(0*x) = bias; the weight never affects the result

    *lead, _D = anno_tracks.shape
    M = 1
    for d in lead:
        M *= d
    out_dtype = anno_tracks.dtype

    # Lane-dense output slab: rows x 128 with rows a multiple of 8 (sublanes).
    rows = max(_SUBLANES, pl.cdiv(M, _LANES))
    rows = ((rows + _SUBLANES - 1) // _SUBLANES) * _SUBLANES

    # Tile the row axis so large outputs stay pipelined and VMEM-bounded:
    # 512 x 128 f32 = 256 KiB per tile (x2 double-buffers = 512 KiB), far
    # under v5e's 16 MiB scoped VMEM and v7x's smaller 64 MiB physical VMEM.
    TR = 512 if rows >= 512 else rows
    rows_padded = ((rows + TR - 1) // TR) * TR
    grid = (rows_padded // TR,)

    bias_smem = jnp.asarray(bias, dtype=jnp.float32).reshape(1)

    out_slab = pl.pallas_call(
        _constant_kernel,
        out_shape=jax.ShapeDtypeStruct((rows_padded, _LANES), out_dtype),
        grid_spec=pltpu.PrefetchScalarGridSpec(
            num_scalar_prefetch=0,
            grid=grid,
            in_specs=[
                # whole (1,) bias array lives in SMEM, no tiling / no VMEM DMA
                pl.BlockSpec(memory_space=pltpu.MemorySpace.SMEM),
            ],
            out_specs=pl.BlockSpec((TR, _LANES), lambda i: (i, 0)),
        ),
        compiler_params=pltpu.CompilerParams(
            # row tiles are independent -> shard across both TCs on v7x
            dimension_semantics=("parallel",),
        ),
    )(bias_smem)

    # Drop lane/row padding, then restore the leading dims -> [B, S]
    flat = out_slab.reshape(-1)[:M]
    return flat.reshape(*lead)


if __name__ == "__main__":
    key = jax.random.PRNGKey(0)
    k1, k2, k3, k4 = jax.random.split(key, 4)

    B, S, D = 2, 8, 64          # input_anno_dim = 64 (module default)
    anno_tracks = jax.random.normal(k1, (B, S, D), dtype=jnp.float32)
    geno_tracks = jax.random.normal(k2, (B, 4, 16), dtype=jnp.float32)  # unused

    # Deterministic nn.Linear(64, 1)-shaped parameters (uniform +/- 1/sqrt(D))
    bound = 1.0 / (D ** 0.5)
    weight = jax.random.uniform(k3, (1, D), minval=-bound, maxval=bound,
                                dtype=jnp.float32)
    bias = jax.random.uniform(k4, (1,), minval=-bound, maxval=bound,
                              dtype=jnp.float32)

    out = constant_forward(geno_tracks, anno_tracks, weight, bias)
    out = jax.block_until_ready(out)

    # Reference: Linear(0 * anno) == bias everywhere, shape (B, S)
    expected = jnp.broadcast_to(bias[0], (B, S))
    assert out.shape == (B, S), out.shape
    assert jnp.allclose(out, expected, atol=1e-6), (out, expected)

    print("KERNEL_OK")
</pallas_src>

<mosaic_0001>
module attributes {stable_mosaic.version = 11 : i64} {
  func.func @_constant_kernel(%arg0: i32, %arg1: memref<1xf32, #tpu.memory_space<smem>>, %arg2: memref<8x128xf32, #tpu.memory_space<vmem>>) attributes {dimension_semantics = [#tpu.dimension_semantics<parallel>], iteration_bounds = array<i64: 1>, scalar_prefetch = 0 : i64, scratch_operands = 0 : i64, tpu.core_type = #tpu.core_type<tc>, window_params = [{transform_indices = @transform_0, window_bounds = array<i64: 1>}, {transform_indices = @transform_1, window_bounds = array<i64: 8, 128>}]} {
    %c0 = arith.constant 0 : index
    %0 = memref.load %arg1[%c0] : memref<1xf32, #tpu.memory_space<smem>>
    %1 = vector.broadcast %0 : f32 to vector<8x128xf32>
    %c0_0 = arith.constant 0 : index
    %c0_1 = arith.constant 0 : index
    %2 = vector.load %arg2[%c0_0, %c0_1] : memref<8x128xf32, #tpu.memory_space<vmem>>, vector<8x128xf32>
    tpu.vector_store %arg2[%c0_0, %c0_1], %1 {strides = array<i32>} : memref<8x128xf32, #tpu.memory_space<vmem>>, vector<8x128xf32>,
    return
  }
  func.func @transform_0(%arg0: i32) -> i32 {
    %c0_i32 = arith.constant 0 : i32
    %c0_i32_0 = arith.constant 0 : i32
    return %c0_i32 : i32
  }
  func.func @transform_1(%arg0: i32) -> (i32, i32) {
    %c0_i32 = arith.constant 0 : i32
    %c0_i32_0 = arith.constant 0 : i32
    return %arg0, %c0_i32 : i32, i32
  }
}

</mosaic_0001>

<llo_original>
// kernel: tpu_custom_call.1
$region0: #{tpu_custom_call.1}
  #allocation0 [shape = 'u32[]', space=smem, size = 0x4, offset = 0x4, fixed_abs, tag = 'smem constant byte address 0x4 - core index']
  #allocation1 [shape = 'u32[144,128]{1,0:T(1,128)}', space=vmem, size = 0x12000, scoped, tag = 'internal scratch']
  #allocation2 [shape = 'f32[1]{0:T(128)S(6)}', space=smem, size = 0x200, scoped, tag = 'scoped memory for tpu_custom_call.1']
  %s0 = inlined_call_operand.<no memory space> [shape: f32[1], index: 0, kind: input, shape index: {}]
  %s1 = inlined_call_operand.hbm [shape: f32[8,128], index: 1, kind: output, shape index: {}]
  %s2 = sld [smem:[#allocation0]]
  $region14: #{tpu_custom_call.1} parent=0
    _
  %s4 = ssub.s32 1, %s2
  %s5 = scalar_select 0, %s4, %s2
  %6 = sst [smem:[#allocation2]] %s0
  $region1: #{tpu_custom_call.1} parent=0
    #allocation3 [shape = 'u8[4096]{0}', space=vmem, size = 0x1000, scoped, tag = 'output window, operand 0, single buffered']
    #allocation4 [shape = 's32[1]{0}', space=sflag, size = 0x4, scoped, tag = 'scoped memory for tpu_custom_call.1']
    %7 = vsyncpa [#allocation4], 0
    // Predicated region
    $region2: #{tpu_custom_call.1} parent=1 // pred_check
      _
    $region3: #{tpu_custom_call.1} parent=1 // pred_check_branch
      %9 = sbr.rel (0) target = $region5
    $region4: #{tpu_custom_call.1} parent=1 // pred_region
      _
    $region5: #{tpu_custom_call.1} parent=1 // pred_fallthru
      _
    %s10 = sld [smem:[#allocation2]]
    %v11 = vstv %s10
    %12 = vst [vmem:[#allocation3] sm:$0xff] %v11
    // Predicated region
    $region6: #{tpu_custom_call.1} parent=1 // pred_check
      _
    $region7: #{tpu_custom_call.1} parent=1 // pred_check_branch
      %14 = sbr.rel (0) target = $region9
    $region8: #{tpu_custom_call.1} parent=1 // pred_region
      %s16 = ssub.s32 128, 128
      %17 = vsyncadd [#allocation4], %s16
      %s19 = sshll.u32 [#allocation3], 4
      %s20 = int_to_ptr.vmem [resolvable:$true] %s19
      %22 = dma.vmem_to_hbm [thread:$0]  %s20, 128, %s1, [#allocation4]
    $region9: #{tpu_custom_call.1} parent=1 // pred_fallthru
      _
    // Predicated region
    $region10: #{tpu_custom_call.1} parent=1 // pred_check
      _
    $region11: #{tpu_custom_call.1} parent=1 // pred_check_branch
      %24 = sbr.rel (0) target = $region13
    $region12: #{tpu_custom_call.1} parent=1 // pred_region
      %25 = dma.done [#allocation4], 128
    $region13: #{tpu_custom_call.1} parent=1 // pred_fallthru
      _
    %26 = vsyncpa [#allocation4], 1

</llo_original>
